<compile_context>
chip_gen: v7x
topology: tpu7x:2x2x1
jax: 0.10.0
libtpu: 0.0.40
codegen_flags: <defaults>
</compile_context>

<pallas_src>
import jax
import jax.numpy as jnp
from jax.experimental import pallas as pl
from jax.experimental.pallas import tpu as pltpu


_LANE = 128


def _chip_config():
    """Return (vmem_limit_bytes, buf_budget_bytes, num_tensorcores)."""
    kind = ""
    try:
        kind = jax.devices()[0].device_kind.lower()
    except Exception:
        pass
    if "v7" in kind:
        # 64 MiB VMEM per TensorCore, 2 TCs per chip (megacore).
        return 48 * 1024 * 1024, 28 * 1024 * 1024, 2
    if any(tag in kind for tag in ("v4", "v5", "v6")):
        # 128 MiB physical VMEM, single TensorCore per chip.
        return 88 * 1024 * 1024, 56 * 1024 * 1024, 1
    # Unknown part: conservative defaults.
    return 32 * 1024 * 1024, 16 * 1024 * 1024, 1


def _pick_row_tile(rows, dim, in_itemsize, out_itemsize, buf_budget, num_cores):
    # dtype-aware sublane packing: 8 rows (f32), 16 (bf16/f16), 32 (int8/fp8).
    sublane = 8 * max(1, 4 // max(1, in_itemsize))
    # VMEM sizing uses the lane-rounded width (physical padding to 128 lanes).
    dim_p = ((dim + _LANE - 1) // _LANE) * _LANE
    # Live bytes per row: input + output blocks double-buffered (native dtypes)
    # plus ~2 f32 temporaries of headroom for the in-kernel compute.
    per_row = dim_p * (2 * in_itemsize + 2 * out_itemsize + 2 * 4)
    tile = (buf_budget // per_row) // sublane * sublane
    tile = max(sublane, tile)
    rows_r = ((rows + sublane - 1) // sublane) * sublane
    if tile >= rows_r:
        # Whole input fits in one step.  Only split the grid when more than
        # one TensorCore (v7x megacore) can actually pick up the extra step.
        if num_cores > 1 and rows_r >= num_cores * sublane:
            tile = ((rows_r // num_cores + sublane - 1) // sublane) * sublane
        else:
            tile = rows_r
    return tile


def _make_rmsnorm_kernel(eps, inv_dim, x_dtype, out_dtype):
    x_is_f32 = jnp.dtype(x_dtype) == jnp.dtype(jnp.float32)

    def kernel(x_ref, w_ref, o_ref):
        # Pass 1: sum of squares in f32 (torch: x.float().pow(2).mean(-1)).
        # mean = sum * (1/dim) with the reciprocal folded at compile time.
        ms = jnp.sum(jnp.square(x_ref[...].astype(jnp.float32)),
                     axis=-1, keepdims=True) * inv_dim
        scale = jax.lax.rsqrt(ms + eps)  # EUP
        # Pass 2: re-read x (keeps the big f32 tile out of the long live set)
        # and apply the per-row scale.
        y = x_ref[...].astype(jnp.float32) * scale
        if not x_is_f32:
            # torch: .type_as(x) before the weight multiply.
            y = y.astype(x_dtype).astype(jnp.float32)
        y = y * w_ref[...]                      # weight already f32
        o_ref[...] = y.astype(out_dtype)

    return kernel


def rmsnorm(x, weight, eps=1e-6):
    """RMSNorm over the last axis of `x`, scaled by `weight` (shape [dim])."""
    orig_shape = x.shape
    dim = orig_shape[-1]
    rows = 1
    for s in orig_shape[:-1]:
        rows *= s

    x2d = x.reshape(rows, dim)
    # Pre-cast the weight once in the wrapper; it's fetched a single time.
    w2d = weight.reshape(1, dim).astype(jnp.float32)

    # torch: output (= norm.type_as(x)) * weight -> usual type promotion.
    out_dtype = jnp.promote_types(x.dtype, weight.dtype)

    in_item = jnp.dtype(x.dtype).itemsize
    out_item = jnp.dtype(out_dtype).itemsize

    vmem_limit, buf_budget, num_cores = _chip_config()
    tile = _pick_row_tile(rows, dim, in_item, out_item, buf_budget, num_cores)
    # cdiv grid: the tail block is masked by Pallas (OOB rows read garbage but
    # each row is independent; OOB writes are dropped).
    grid = (pl.cdiv(rows, tile),)

    kernel = _make_rmsnorm_kernel(float(eps), 1.0 / float(dim), x.dtype, out_dtype)

    cost = pl.CostEstimate(
        flops=int(5 * rows * dim),
        transcendentals=int(rows),
        bytes_accessed=int(rows * dim * (in_item + out_item) + dim * 4),
    )

    out = pl.pallas_call(
        kernel,
        out_shape=jax.ShapeDtypeStruct((rows, dim), out_dtype),
        grid_spec=pltpu.PrefetchScalarGridSpec(
            num_scalar_prefetch=0,
            grid=grid,
            in_specs=[
                # x row tile; last dim spans the full (possibly non-128) axis.
                pl.BlockSpec((tile, dim), lambda i: (i, 0)),
                # weight: constant-index block -> DMA'd once, reused each step.
                pl.BlockSpec((1, dim), lambda i: (0, 0)),
            ],
            out_specs=pl.BlockSpec((tile, dim), lambda i: (i, 0)),
        ),
        compiler_params=pltpu.CompilerParams(
            dimension_semantics=("parallel",),
            vmem_limit_bytes=vmem_limit,
        ),
        cost_estimate=cost,
    )(x2d, w2d)

    return out.reshape(orig_shape[:-1] + (dim,))


def rmsnorm_ref(x, weight, eps=1e-6):
    xf = x.astype(jnp.float32)
    ms = jnp.mean(xf * xf, axis=-1, keepdims=True)
    y = (xf * jax.lax.rsqrt(ms + eps)).astype(x.dtype)
    return y * weight


if __name__ == "__main__":
    key = jax.random.PRNGKey(0)
    batch, seq, hidden = 2, 8, 32
    x = jax.random.normal(key, (batch, seq, hidden), dtype=jnp.float32)
    # Deterministic parameter init matching nn.Parameter(torch.ones(dim)).
    weight = jnp.ones((hidden,), dtype=jnp.float32)

    out = rmsnorm(x, weight, eps=1e-6)
    jax.block_until_ready(out)
    ref = rmsnorm_ref(x, weight, eps=1e-6)
    assert out.shape == x.shape and out.dtype == x.dtype
    assert jnp.allclose(out, ref, atol=1e-5, rtol=1e-5)

    # Odd row count exercises the cdiv / masked-tail path (no tile collapse),
    # with hidden=32 also exercising the unpadded non-128 last dim.
    x2 = jax.random.normal(jax.random.PRNGKey(1), (3, 5, hidden), dtype=jnp.float32)
    out2 = rmsnorm(x2, weight, eps=1e-6)
    jax.block_until_ready(out2)
    assert jnp.allclose(out2, rmsnorm_ref(x2, weight, eps=1e-6), atol=1e-5, rtol=1e-5)

    # bf16 input + f32 weight: exercises the type_as round-trip and the
    # torch-style dtype promotion of the final multiply.
    x3 = jax.random.normal(jax.random.PRNGKey(2), (4, 8, hidden), dtype=jnp.bfloat16)
    out3 = rmsnorm(x3, weight, eps=1e-6)
    jax.block_until_ready(out3)
    ref3 = rmsnorm_ref(x3, weight, eps=1e-6)
    assert out3.dtype == ref3.dtype
    assert jnp.allclose(out3.astype(jnp.float32), ref3.astype(jnp.float32),
                        atol=2e-2, rtol=2e-2)

    print("KERNEL_OK")
</pallas_src>

<mosaic_0001>
module attributes {stable_mosaic.version = 11 : i64} {
  func.func @kernel(%arg0: i32, %arg1: memref<16x32xf32, #tpu.memory_space<vmem>>, %arg2: memref<1x32xf32, #tpu.memory_space<vmem>>, %arg3: memref<16x32xf32, #tpu.memory_space<vmem>>) attributes {dimension_semantics = [#tpu.dimension_semantics<parallel>], iteration_bounds = array<i64: 1>, scalar_prefetch = 0 : i64, scratch_operands = 0 : i64, tpu.core_type = #tpu.core_type<tc>, window_params = [{transform_indices = @transform_0, window_bounds = array<i64: 16, 32>}, {pipeline_mode = #tpu.pipeline_mode<synchronous>, transform_indices = @transform_1, window_bounds = array<i64: 1, 32>}, {transform_indices = @transform_2, window_bounds = array<i64: 16, 32>}]} {
    %c0 = arith.constant 0 : index
    %c0_0 = arith.constant 0 : index
    %0 = vector.load %arg1[%c0, %c0_0] : memref<16x32xf32, #tpu.memory_space<vmem>>, vector<16x32xf32>
    %1 = arith.mulf %0, %0 : vector<16x32xf32>
    %cst = arith.constant dense<0.000000e+00> : vector<16xf32>
    %2 = vector.multi_reduction <add>, %1, %cst [1] : vector<16x32xf32> to vector<16xf32>
    %3 = vector.shape_cast %2 : vector<16xf32> to vector<16x1xf32>
    %cst_1 = arith.constant 3.125000e-02 : f32
    %4 = vector.broadcast %cst_1 : f32 to vector<16x1xf32>
    %5 = arith.mulf %3, %4 : vector<16x1xf32>
    %cst_2 = arith.constant 9.99999997E-7 : f32
    %6 = vector.broadcast %cst_2 : f32 to vector<16x1xf32>
    %7 = arith.addf %5, %6 : vector<16x1xf32>
    %8 = math.rsqrt %7 : vector<16x1xf32>
    %c0_3 = arith.constant 0 : index
    %c0_4 = arith.constant 0 : index
    %9 = vector.load %arg1[%c0_3, %c0_4] : memref<16x32xf32, #tpu.memory_space<vmem>>, vector<16x32xf32>
    %10 = vector.broadcast %8 : vector<16x1xf32> to vector<16x32xf32>
    %11 = arith.mulf %9, %10 : vector<16x32xf32>
    %c0_5 = arith.constant 0 : index
    %c0_6 = arith.constant 0 : index
    %12 = vector.load %arg2[%c0_5, %c0_6] : memref<1x32xf32, #tpu.memory_space<vmem>>, vector<1x32xf32>
    %13 = vector.broadcast %12 : vector<1x32xf32> to vector<16x32xf32>
    %14 = arith.mulf %11, %13 : vector<16x32xf32>
    %c0_7 = arith.constant 0 : index
    %c0_8 = arith.constant 0 : index
    %15 = vector.load %arg3[%c0_7, %c0_8] : memref<16x32xf32, #tpu.memory_space<vmem>>, vector<16x32xf32>
    tpu.vector_store %arg3[%c0_7, %c0_8], %14 {strides = array<i32>} : memref<16x32xf32, #tpu.memory_space<vmem>>, vector<16x32xf32>,
    return
  }
  func.func @transform_0(%arg0: i32) -> (i32, i32) {
    %c0_i32 = arith.constant 0 : i32
    %c0_i32_0 = arith.constant 0 : i32
    return %arg0, %c0_i32 : i32, i32
  }
  func.func @transform_1(%arg0: i32) -> (i32, i32) {
    %c0_i32 = arith.constant 0 : i32
    %c0_i32_0 = arith.constant 0 : i32
    %c0_i32_1 = arith.constant 0 : i32
    return %c0_i32, %c0_i32_0 : i32, i32
  }
  func.func @transform_2(%arg0: i32) -> (i32, i32) {
    %c0_i32 = arith.constant 0 : i32
    %c0_i32_0 = arith.constant 0 : i32
    return %arg0, %c0_i32 : i32, i32
  }
}

</mosaic_0001>

<llo_original>
// kernel: tpu_custom_call.1
$region0: #{tpu_custom_call.1}
  #allocation0 [shape = 'u32[]', space=smem, size = 0x4, offset = 0x4, fixed_abs, tag = 'smem constant byte address 0x4 - core index']
  #allocation1 [shape = 'u32[144,128]{1,0:T(1,128)}', space=vmem, size = 0x12000, scoped, tag = 'internal scratch']
  %s0 = inlined_call_operand.hbm [shape: f32[16,32], index: 0, kind: input, shape index: {}]
  %s1 = inlined_call_operand.vmem [shape: f32[1,32], index: 1, kind: input, shape index: {}]
  %s2 = inlined_call_operand.hbm [shape: f32[16,32], index: 2, kind: output, shape index: {}]
  %s3 = sld [smem:[#allocation0]]
  $region22: #{tpu_custom_call.1} parent=0
    _
  %s5 = ssub.s32 1, %s3
  %s6 = scalar_select 0, %s5, %s3
  $region1: #{tpu_custom_call.1} parent=0
    #allocation2 [shape = 'u8[8192]{0}', space=vmem, size = 0x2000, scoped, tag = 'input window, operand 0, single buffered']
    #allocation3 [shape = 's32[1]{0}', space=sflag, size = 0x4, scoped, tag = 'scoped memory for tpu_custom_call.1']
    #allocation4 [shape = 's32[1]{0}', space=sflag, size = 0x4, scoped, tag = 'scoped memory for tpu_custom_call.1']
    #allocation5 [shape = 'u8[8192]{0}', space=vmem, size = 0x2000, scoped, tag = 'output window, operand 0, single buffered']
    %7 = vsyncpa [#allocation3], 0
    %8 = vsyncpa [#allocation4], 0
    // Predicated region
    $region2: #{tpu_custom_call.1} parent=1 // pred_check
      _
    $region3: #{tpu_custom_call.1} parent=1 // pred_check_branch
      %10 = sbr.rel (0) target = $region5
    $region4: #{tpu_custom_call.1} parent=1 // pred_region
      %s12 = ssub.s32 256, 256
      %13 = vsyncadd [#allocation3], %s12
      %s14 = sshll.u32 [#allocation2], 4
      %s15 = int_to_ptr.vmem [resolvable:$true] %s14
      %20 = dma.hbm_to_vmem [thread:$0]  %s0, 256, %s15, [#allocation3], 128, 128, 8
    $region5: #{tpu_custom_call.1} parent=1 // pred_fallthru
      _
    // Predicated region
    $region6: #{tpu_custom_call.1} parent=1 // pred_check
      _
    $region7: #{tpu_custom_call.1} parent=1 // pred_check_branch
      %22 = sbr.rel (0) target = $region9
    $region8: #{tpu_custom_call.1} parent=1 // pred_region
      _
    $region9: #{tpu_custom_call.1} parent=1 // pred_fallthru
      _
    // Predicated region
    $region10: #{tpu_custom_call.1} parent=1 // pred_check
      _
    $region11: #{tpu_custom_call.1} parent=1 // pred_check_branch
      %24 = sbr.rel (0) target = $region13
    $region12: #{tpu_custom_call.1} parent=1 // pred_region
      %25 = dma.done [#allocation3], 256
    $region13: #{tpu_custom_call.1} parent=1 // pred_fallthru
      _
    %v26 = vld [vmem:[#allocation2] sm:$0xff]
    %v27 = vld [vmem:[#allocation2 + $0x8] sm:$0xff]
    %v28 = vmul.f32 %v26, %v26
    %v29 = vmul.f32 %v27, %v27
    %vm30 = vcmask 261120
    %v31 = vsel %vm30, %v28, 0.0
    %32 = vadd.xlane.f32.xlu0 %v31
    %v33 = vpop.xlane.xlu0 %32
    %v34 = vsel %vm30, %v29, 0.0
    %35 = vadd.xlane.f32.xlu0 %v34
    %v36 = vpop.xlane.xlu0 %35
    %v37 = vmul.f32 %v33, 0.03125
    %v38 = vmul.f32 %v36, 0.03125
    %v39 = vadd.f32 %v37, 1e-06
    %v40 = vadd.f32 %v38, 1e-06
    %v41 = vrsqrt.pop %v39
    %v42 = vrsqrt.pop %v40
    %v43 = vmul.f32 %v26, %v41
    %v44 = vmul.f32 %v27, %v42
    %v45 = vld [vmem:[%s1] sm:$0x1]
    %v47 = vlaneseq
    %v48 = vshrl.u32 %v47, 7
    %v49 = vsub.s32 0, %v48
    %v50 = vrot.slane %v45, %v49
    %v52 = vmul.f32 %v43, %v50
    %v53 = vmul.f32 %v44, %v50
    %54 = vst.msk [vmem:[#allocation5] sm:$0xff] %vm30, %v52
    %55 = vst.msk [vmem:[#allocation5 + $0x8] sm:$0xff] %vm30, %v53
    // Predicated region
    $region14: #{tpu_custom_call.1} parent=1 // pred_check
      _
    $region15: #{tpu_custom_call.1} parent=1 // pred_check_branch
      %57 = sbr.rel (0) target = $region17
    $region16: #{tpu_custom_call.1} parent=1 // pred_region
      %s59 = ssub.s32 256, 256
      %60 = vsyncadd [#allocation4], %s59
      %s61 = sshll.u32 [#allocation5], 4
      %s62 = int_to_ptr.vmem [resolvable:$true] %s61
      %67 = dma.vmem_to_hbm [thread:$0]  %s62, 256, %s2, [#allocation4], 128, 128, 8
    $region17: #{tpu_custom_call.1} parent=1 // pred_fallthru
      _
    // Predicated region
    $region18: #{tpu_custom_call.1} parent=1 // pred_check
      _
    $region19: #{tpu_custom_call.1} parent=1 // pred_check_branch
      %69 = sbr.rel (0) target = $region21
    $region20: #{tpu_custom_call.1} parent=1 // pred_region
      %70 = dma.done [#allocation4], 256
    $region21: #{tpu_custom_call.1} parent=1 // pred_fallthru
      _
    %71 = vsyncpa [#allocation3], 1
    %72 = vsyncpa [#allocation4], 1

</llo_original>
